<compile_context>
chip_gen: v7x
topology: tpu7x:2x2x1
jax: 0.10.0
libtpu: 0.0.40
codegen_flags: <defaults>
</compile_context>

<pallas_src>
import jax
import jax.numpy as jnp
import numpy as np
from jax.experimental import pallas as pl
from jax.experimental.pallas import tpu as pltpu


def _round_up(x, m):
    return ((x + m - 1) // m) * m


def hybrid_embed_kernel(p_ref, wc_ref, bc_ref, wp_ref, bp_ref, o_ref):
    # p_ref : (TM, Kp)  bf16  im2col patch tile (streamed over the grid)
    # wc_ref: (Kp, Fp)  bf16  backbone conv weight (VMEM-resident)
    # bc_ref: (1,  Fp)  f32   backbone conv bias   (VMEM-resident)
    # wp_ref: (Fp, Ep)  bf16  projection weight (nn.Linear weight, transposed)
    # bp_ref: (1,  Ep)  f32   projection bias
    # o_ref : (TM, Ep)  f32
    feat = jnp.dot(p_ref[...], wc_ref[...], preferred_element_type=jnp.float32)
    feat = jnp.maximum(feat + bc_ref[...], 0.0)              # conv bias + ReLU
    out = jnp.dot(feat.astype(jnp.bfloat16), wp_ref[...],
                  preferred_element_type=jnp.float32)
    o_ref[...] = (out + bp_ref[...]).astype(o_ref.dtype)     # nn.Linear proj


def hybrid_embed(x_nchw, conv_w, conv_b, proj_w, proj_b, *, patch, tm=128):
    """x_nchw: (B, C, H, W) float32.  Returns (B, (H//k)*(W//k), embed_dim)."""
    B, C, H, W = x_nchw.shape
    F_dim = conv_w.shape[0]
    E = proj_w.shape[0]
    Hf, Wf = H // patch, W // patch
    N = Hf * Wf
    M = B * N
    Kc = C * patch * patch

    # --- lane-dense padded sizes (multiples of 128) & M tiling --------------
    Kp = _round_up(Kc, 128)
    Fp = _round_up(F_dim, 128)
    Ep = _round_up(E, 128)
    tm = min(tm, _round_up(M, 8))        # tile size (multiple of 8 sublanes)
    Mp = _round_up(M, tm)                # pad M so the grid divides evenly

    # --- glue: im2col of non-overlapping patches (conv with k == stride) ----
    p = x_nchw.reshape(B, C, Hf, patch, Wf, patch)
    p = p.transpose(0, 2, 4, 1, 3, 5).reshape(M, Kc)
    p = jnp.pad(p.astype(jnp.bfloat16), ((0, Mp - M), (0, Kp - Kc)))

    wc = jnp.pad(conv_w.reshape(F_dim, Kc).T.astype(jnp.bfloat16),
                 ((0, Kp - Kc), (0, Fp - F_dim)))             # (Kp, Fp)
    bc = jnp.pad(conv_b.reshape(1, F_dim).astype(jnp.float32),
                 ((0, 0), (0, Fp - F_dim)))                   # (1, Fp)
    wp = jnp.pad(proj_w.T.astype(jnp.bfloat16),
                 ((0, Fp - F_dim), (0, Ep - E)))              # (Fp, Ep)
    bp = jnp.pad(proj_b.reshape(1, E).astype(jnp.float32),
                 ((0, 0), (0, Ep - E)))                       # (1, Ep)

    out = pl.pallas_call(
        hybrid_embed_kernel,
        out_shape=jax.ShapeDtypeStruct((Mp, Ep), jnp.float32),
        grid_spec=pltpu.PrefetchScalarGridSpec(
            num_scalar_prefetch=0,
            grid=(Mp // tm,),
            in_specs=[
                pl.BlockSpec((tm, Kp), lambda i: (i, 0)),     # patches: tiled
                pl.BlockSpec((Kp, Fp), lambda i: (0, 0)),     # weights: resident
                pl.BlockSpec((1, Fp), lambda i: (0, 0)),
                pl.BlockSpec((Fp, Ep), lambda i: (0, 0)),
                pl.BlockSpec((1, Ep), lambda i: (0, 0)),
            ],
            out_specs=pl.BlockSpec((tm, Ep), lambda i: (i, 0)),
        ),
        compiler_params=pltpu.CompilerParams(
            dimension_semantics=("parallel",),                # megacore on v7x
            vmem_limit_bytes=48 * 1024 * 1024,
        ),
    )(p, wc, bc, wp, bp)

    return out[:M, :E].reshape(B, N, E)


if __name__ == "__main__":
    # Small shapes consistent with the module's forward:
    #   input image (B, in_chans, H, W) = (2, 4, 16, 16)
    #   backbone: Conv2d(4, 32, kernel=4, stride=4) + ReLU -> feature (2, 32, 4, 4)
    #   num_patches = 16, proj: Linear(32 -> 32)
    B, C, H, W = 2, 4, 16, 16
    patch = 4
    feat_dim, embed_dim = 32, 32

    key = jax.random.PRNGKey(0)
    k0, k1, k2, k3, k4 = jax.random.split(key, 5)
    x = jax.random.normal(k0, (B, C, H, W), jnp.float32)
    conv_w = 0.1 * jax.random.normal(k1, (feat_dim, C, patch, patch), jnp.float32)
    conv_b = 0.1 * jax.random.normal(k2, (feat_dim,), jnp.float32)
    proj_w = 0.1 * jax.random.normal(k3, (embed_dim, feat_dim), jnp.float32)
    proj_b = 0.1 * jax.random.normal(k4, (embed_dim,), jnp.float32)

    out = hybrid_embed(x, conv_w, conv_b, proj_w, proj_b, patch=patch)
    out = jax.block_until_ready(out)

    # --- numpy f32 reference (conv-as-matmul, ReLU, flatten+transpose, Linear) ---
    xn = np.asarray(x)
    pn = xn.reshape(B, C, H // patch, patch, W // patch, patch)
    pn = pn.transpose(0, 2, 4, 1, 3, 5).reshape(B * (H // patch) * (W // patch),
                                                C * patch * patch)
    wcn = np.asarray(conv_w).reshape(feat_dim, -1).T
    featn = np.maximum(pn @ wcn + np.asarray(conv_b)[None, :], 0.0)
    refn = featn @ np.asarray(proj_w).T + np.asarray(proj_b)[None, :]
    refn = refn.reshape(B, (H // patch) * (W // patch), embed_dim)

    assert out.shape == (B, (H // patch) * (W // patch), embed_dim)
    # bf16 matmul inputs (f32 accumulation) -> relaxed tolerance vs f32 reference.
    assert np.allclose(np.asarray(out), refn, atol=5e-2, rtol=5e-2)
    print("KERNEL_OK")
</pallas_src>

<mosaic_0001>
module attributes {stable_mosaic.version = 11 : i64} {
  func.func @hybrid_embed_kernel(%arg0: i32, %arg1: memref<32x128xbf16, #tpu.memory_space<vmem>>, %arg2: memref<128x128xbf16, #tpu.memory_space<vmem>>, %arg3: memref<1x128xf32, #tpu.memory_space<vmem>>, %arg4: memref<128x128xbf16, #tpu.memory_space<vmem>>, %arg5: memref<1x128xf32, #tpu.memory_space<vmem>>, %arg6: memref<32x128xf32, #tpu.memory_space<vmem>>) attributes {dimension_semantics = [#tpu.dimension_semantics<parallel>], iteration_bounds = array<i64: 1>, scalar_prefetch = 0 : i64, scratch_operands = 0 : i64, tpu.core_type = #tpu.core_type<tc>, window_params = [{transform_indices = @transform_0, window_bounds = array<i64: 32, 128>}, {pipeline_mode = #tpu.pipeline_mode<synchronous>, transform_indices = @transform_1, window_bounds = array<i64: 128, 128>}, {pipeline_mode = #tpu.pipeline_mode<synchronous>, transform_indices = @transform_2, window_bounds = array<i64: 1, 128>}, {pipeline_mode = #tpu.pipeline_mode<synchronous>, transform_indices = @transform_3, window_bounds = array<i64: 128, 128>}, {pipeline_mode = #tpu.pipeline_mode<synchronous>, transform_indices = @transform_4, window_bounds = array<i64: 1, 128>}, {transform_indices = @transform_5, window_bounds = array<i64: 32, 128>}]} {
    %c0 = arith.constant 0 : index
    %c0_0 = arith.constant 0 : index
    %0 = vector.load %arg1[%c0, %c0_0] : memref<32x128xbf16, #tpu.memory_space<vmem>>, vector<32x128xbf16>
    %c0_1 = arith.constant 0 : index
    %c0_2 = arith.constant 0 : index
    %1 = vector.load %arg2[%c0_1, %c0_2] : memref<128x128xbf16, #tpu.memory_space<vmem>>, vector<128x128xbf16>
    %cst = arith.constant dense<0.000000e+00> : vector<32x128xf32>
    %2 = tpu.matmul %0, %1, %cst {dimension_numbers = #tpu.dot_dimension_numbers<[1], [0], [0], [1], [0, 0, 1, 1], [], []>} : vector<32x128xbf16>, vector<128x128xbf16>, vector<32x128xf32> -> vector<32x128xf32>
    %c0_3 = arith.constant 0 : index
    %c0_4 = arith.constant 0 : index
    %3 = vector.load %arg3[%c0_3, %c0_4] : memref<1x128xf32, #tpu.memory_space<vmem>>, vector<1x128xf32>
    %4 = vector.broadcast %3 : vector<1x128xf32> to vector<32x128xf32>
    %5 = arith.addf %2, %4 : vector<32x128xf32>
    %cst_5 = arith.constant 0.000000e+00 : f32
    %6 = vector.broadcast %cst_5 : f32 to vector<32x128xf32>
    %7 = arith.maximumf %5, %6 : vector<32x128xf32>
    %8 = arith.truncf %7 : vector<32x128xf32> to vector<32x128xbf16>
    %c0_6 = arith.constant 0 : index
    %c0_7 = arith.constant 0 : index
    %9 = vector.load %arg4[%c0_6, %c0_7] : memref<128x128xbf16, #tpu.memory_space<vmem>>, vector<128x128xbf16>
    %cst_8 = arith.constant dense<0.000000e+00> : vector<32x128xf32>
    %10 = tpu.matmul %8, %9, %cst_8 {dimension_numbers = #tpu.dot_dimension_numbers<[1], [0], [0], [1], [0, 0, 1, 1], [], []>} : vector<32x128xbf16>, vector<128x128xbf16>, vector<32x128xf32> -> vector<32x128xf32>
    %c0_9 = arith.constant 0 : index
    %c0_10 = arith.constant 0 : index
    %11 = vector.load %arg5[%c0_9, %c0_10] : memref<1x128xf32, #tpu.memory_space<vmem>>, vector<1x128xf32>
    %12 = vector.broadcast %11 : vector<1x128xf32> to vector<32x128xf32>
    %13 = arith.addf %10, %12 : vector<32x128xf32>
    %c0_11 = arith.constant 0 : index
    %c0_12 = arith.constant 0 : index
    %14 = vector.load %arg6[%c0_11, %c0_12] : memref<32x128xf32, #tpu.memory_space<vmem>>, vector<32x128xf32>
    tpu.vector_store %arg6[%c0_11, %c0_12], %13 {strides = array<i32>} : memref<32x128xf32, #tpu.memory_space<vmem>>, vector<32x128xf32>,
    return
  }
  func.func @transform_0(%arg0: i32) -> (i32, i32) {
    %c0_i32 = arith.constant 0 : i32
    %c0_i32_0 = arith.constant 0 : i32
    return %arg0, %c0_i32 : i32, i32
  }
  func.func @transform_1(%arg0: i32) -> (i32, i32) {
    %c0_i32 = arith.constant 0 : i32
    %c0_i32_0 = arith.constant 0 : i32
    %c0_i32_1 = arith.constant 0 : i32
    return %c0_i32, %c0_i32_0 : i32, i32
  }
  func.func @transform_2(%arg0: i32) -> (i32, i32) {
    %c0_i32 = arith.constant 0 : i32
    %c0_i32_0 = arith.constant 0 : i32
    %c0_i32_1 = arith.constant 0 : i32
    return %c0_i32, %c0_i32_0 : i32, i32
  }
  func.func @transform_3(%arg0: i32) -> (i32, i32) {
    %c0_i32 = arith.constant 0 : i32
    %c0_i32_0 = arith.constant 0 : i32
    %c0_i32_1 = arith.constant 0 : i32
    return %c0_i32, %c0_i32_0 : i32, i32
  }
  func.func @transform_4(%arg0: i32) -> (i32, i32) {
    %c0_i32 = arith.constant 0 : i32
    %c0_i32_0 = arith.constant 0 : i32
    %c0_i32_1 = arith.constant 0 : i32
    return %c0_i32, %c0_i32_0 : i32, i32
  }
  func.func @transform_5(%arg0: i32) -> (i32, i32) {
    %c0_i32 = arith.constant 0 : i32
    %c0_i32_0 = arith.constant 0 : i32
    return %arg0, %c0_i32 : i32, i32
  }
}

</mosaic_0001>

<llo_original>
// kernel: tpu_custom_call.1
$region0: #{tpu_custom_call.1}
  #allocation0 [shape = 'u32[]', space=smem, size = 0x4, offset = 0x4, fixed_abs, tag = 'smem constant byte address 0x4 - core index']
  #allocation1 [shape = 'u32[144,128]{1,0:T(1,128)}', space=vmem, size = 0x12000, scoped, tag = 'internal scratch']
  %s0 = inlined_call_operand.hbm [shape: bf16[32,128], index: 0, kind: input, shape index: {}]
  %s1 = inlined_call_operand.hbm [shape: bf16[128,128], index: 1, kind: input, shape index: {}]
  %s2 = inlined_call_operand.vmem [shape: f32[1,128], index: 2, kind: input, shape index: {}]
  %s3 = inlined_call_operand.hbm [shape: bf16[128,128], index: 3, kind: input, shape index: {}]
  %s4 = inlined_call_operand.vmem [shape: f32[1,128], index: 4, kind: input, shape index: {}]
  %s5 = inlined_call_operand.hbm [shape: f32[32,128], index: 5, kind: output, shape index: {}]
  %s6 = sld [smem:[#allocation0]]
  $region42: #{tpu_custom_call.1} parent=0
    _
  %s8 = ssub.s32 1, %s6
  %s9 = scalar_select 0, %s8, %s6
  $region1: #{tpu_custom_call.1} parent=0
    #allocation2 [shape = 'u8[8192]{0}', space=vmem, size = 0x2000, scoped, tag = 'input window, operand 0, single buffered']
    #allocation3 [shape = 's32[1]{0}', space=sflag, size = 0x4, scoped, tag = 'scoped memory for tpu_custom_call.1']
    #allocation4 [shape = 's32[1]{0}', space=sflag, size = 0x4, scoped, tag = 'scoped memory for tpu_custom_call.1']
    #allocation5 [shape = 'u8[32768]{0}', space=vmem, size = 0x8000, scoped, tag = 'input window, operand 1, single buffered']
    #allocation6 [shape = 's32[1]{0}', space=sflag, size = 0x4, scoped, tag = 'scoped memory for tpu_custom_call.1']
    #allocation7 [shape = 'u8[32768]{0}', space=vmem, size = 0x8000, scoped, tag = 'input window, operand 3, single buffered']
    #allocation8 [shape = 'u8[16384]{0}', space=vmem, size = 0x4000, scoped, tag = 'output window, operand 0, single buffered']
    %10 = vsyncpa [#allocation3], 0
    %11 = vsyncpa [#allocation6], 0
    %12 = vsyncpa [#allocation4], 0
    // Predicated region
    $region2: #{tpu_custom_call.1} parent=1 // pred_check
      _
    $region3: #{tpu_custom_call.1} parent=1 // pred_check_branch
      %14 = sbr.rel (0) target = $region5
    $region4: #{tpu_custom_call.1} parent=1 // pred_region
      %s16 = ssub.s32 256, 256
      %17 = vsyncadd [#allocation3], %s16
      %s18 = sshll.u32 [#allocation2], 4
      %s19 = int_to_ptr.vmem [resolvable:$true] %s18
      %24 = dma.hbm_to_vmem [thread:$0]  %s0, 256, %s19, [#allocation3], 64, 64, 4
    $region5: #{tpu_custom_call.1} parent=1 // pred_fallthru
      _
    // Predicated region
    $region6: #{tpu_custom_call.1} parent=1 // pred_check
      _
    $region7: #{tpu_custom_call.1} parent=1 // pred_check_branch
      %26 = sbr.rel (0) target = $region9
    $region8: #{tpu_custom_call.1} parent=1 // pred_region
      %s28 = ssub.s32 1024, 1024
      %29 = vsyncadd [#allocation6], %s28
      %s30 = sshll.u32 [#allocation5], 4
      %s31 = int_to_ptr.vmem [resolvable:$true] %s30
      %36 = dma.hbm_to_vmem [thread:$0]  %s1, 1024, %s31, [#allocation6], 64, 64, 4
    $region9: #{tpu_custom_call.1} parent=1 // pred_fallthru
      _
    // Predicated region
    $region10: #{tpu_custom_call.1} parent=1 // pred_check
      _
    $region11: #{tpu_custom_call.1} parent=1 // pred_check_branch
      %38 = sbr.rel (0) target = $region13
    $region12: #{tpu_custom_call.1} parent=1 // pred_region
      _
    $region13: #{tpu_custom_call.1} parent=1 // pred_fallthru
      _
    // Predicated region
    $region14: #{tpu_custom_call.1} parent=1 // pred_check
      _
    $region15: #{tpu_custom_call.1} parent=1 // pred_check_branch
      %40 = sbr.rel (0) target = $region17
    $region16: #{tpu_custom_call.1} parent=1 // pred_region
      %s42 = ssub.s32 1024, 1024
      %43 = vsyncadd [#allocation6], %s42
      %s44 = sshll.u32 [#allocation7], 4
      %s45 = int_to_ptr.vmem [resolvable:$true] %s44
      %50 = dma.hbm_to_vmem [thread:$0]  %s3, 1024, %s45, [#allocation6], 64, 64, 4
    $region17: #{tpu_custom_call.1} parent=1 // pred_fallthru
      _
    // Predicated region
    $region18: #{tpu_custom_call.1} parent=1 // pred_check
      _
    $region19: #{tpu_custom_call.1} parent=1 // pred_check_branch
      %52 = sbr.rel (0) target = $region21
    $region20: #{tpu_custom_call.1} parent=1 // pred_region
      _
    $region21: #{tpu_custom_call.1} parent=1 // pred_fallthru
      _
    // Predicated region
    $region22: #{tpu_custom_call.1} parent=1 // pred_check
      _
    $region23: #{tpu_custom_call.1} parent=1 // pred_check_branch
      %54 = sbr.rel (0) target = $region25
    $region24: #{tpu_custom_call.1} parent=1 // pred_region
      %55 = dma.done [#allocation3], 256
    $region25: #{tpu_custom_call.1} parent=1 // pred_fallthru
      _
    // Predicated region
    $region26: #{tpu_custom_call.1} parent=1 // pred_check
      _
    $region27: #{tpu_custom_call.1} parent=1 // pred_check_branch
      %57 = sbr.rel (0) target = $region29
    $region28: #{tpu_custom_call.1} parent=1 // pred_region
      %58 = dma.done [#allocation6], 1024
    $region29: #{tpu_custom_call.1} parent=1 // pred_fallthru
      _
    // Predicated region
    $region30: #{tpu_custom_call.1} parent=1 // pred_check
      _
    $region31: #{tpu_custom_call.1} parent=1 // pred_check_branch
      %60 = sbr.rel (0) target = $region33
    $region32: #{tpu_custom_call.1} parent=1 // pred_region
      %61 = dma.done [#allocation6], 1024
    $region33: #{tpu_custom_call.1} parent=1 // pred_fallthru
      _
    %v63 = vld [vmem:[#allocation2] sm:$0xf]
    %v64 = vld [vmem:[#allocation2 + $0x4] sm:$0xf]
    %v65 = vld [vmem:[#allocation2 + $0x8] sm:$0xf]
    %v66 = vld [vmem:[#allocation2 + $0xc] sm:$0xf]
    %v67 = vld [vmem:[#allocation5] sm:$0xf]
    %v68 = vld [vmem:[#allocation5 + $0x4] sm:$0xf]
    %v69 = vld [vmem:[#allocation5 + $0x8] sm:$0xf]
    %v70 = vld [vmem:[#allocation5 + $0xc] sm:$0xf]
    %v71 = vld [vmem:[#allocation5 + $0x10] sm:$0xf]
    %v72 = vld [vmem:[#allocation5 + $0x14] sm:$0xf]
    %v73 = vld [vmem:[#allocation5 + $0x18] sm:$0xf]
    %v74 = vld [vmem:[#allocation5 + $0x1c] sm:$0xf]
    %v75 = vld [vmem:[#allocation5 + $0x20] sm:$0xf]
    %v76 = vld [vmem:[#allocation5 + $0x24] sm:$0xf]
    %v77 = vld [vmem:[#allocation5 + $0x28] sm:$0xf]
    %v78 = vld [vmem:[#allocation5 + $0x2c] sm:$0xf]
    %v79 = vld [vmem:[#allocation5 + $0x30] sm:$0xf]
    %v80 = vld [vmem:[#allocation5 + $0x34] sm:$0xf]
    %v81 = vld [vmem:[#allocation5 + $0x38] sm:$0xf]
    %v82 = vld [vmem:[#allocation5 + $0x3c] sm:$0xf]
    %v83 = vld [vmem:[%s2] sm:$0x1]
    %v85 = vlaneseq
    %v86 = vshrl.u32 %v85, 7
    %v87 = vsub.s32 0, %v86
    %v88 = vrot.slane %v83, %v87
    %v94 = vunpack.c.l.b16 %v63
    %v95 = vunpack.c.l.b16 %v64
    %v96 = vunpack.c.l.b16 %v65
    %v97 = vunpack.c.l.b16 %v66
    %v98 = vpack.c.b16 %v95, %v94
    %v99 = vpack.c.b16 %v97, %v96
    %v118 = vunpack.c.l.b16 %v67
    %v119 = vunpack.c.l.b16 %v68
    %v120 = vunpack.c.l.b16 %v69
    %v121 = vunpack.c.l.b16 %v70
    %v122 = vunpack.c.l.b16 %v71
    %v123 = vunpack.c.l.b16 %v72
    %v124 = vunpack.c.l.b16 %v73
    %v125 = vunpack.c.l.b16 %v74
    %v126 = vunpack.c.l.b16 %v75
    %v127 = vunpack.c.l.b16 %v76
    %v128 = vunpack.c.l.b16 %v77
    %v129 = vunpack.c.l.b16 %v78
    %v130 = vunpack.c.l.b16 %v79
    %v131 = vunpack.c.l.b16 %v80
    %v132 = vunpack.c.l.b16 %v81
    %v133 = vunpack.c.l.b16 %v82
    %v134 = vpack.c.b16 %v119, %v118
    %v135 = vpack.c.b16 %v121, %v120
    %v136 = vpack.c.b16 %v123, %v122
    %v137 = vpack.c.b16 %v125, %v124
    %v138 = vpack.c.b16 %v127, %v126
    %v139 = vpack.c.b16 %v129, %v128
    %v140 = vpack.c.b16 %v131, %v130
    %v141 = vpack.c.b16 %v133, %v132
    %150 = vmatprep.subr.bf16.mxu0 0
    %151 = vmatpush1.bf16.msra.mxu0 %v134
    %152 = vmatprep.subr.bf16.mxu0 0
    %153 = vmatpush1.bf16.msra.mxu0 %v135
    %154 = vmatprep.subr.bf16.mxu0 0
    %155 = vmatpush1.bf16.msra.mxu0 %v136
    %156 = vmatprep.subr.bf16.mxu0 0
    %157 = vmatpush1.bf16.msra.mxu0 %v137
    %158 = vmatprep.subr.bf16.mxu0 0
    %159 = vmatpush1.bf16.msra.mxu0 %v138
    %160 = vmatprep.subr.bf16.mxu0 0
    %161 = vmatpush1.bf16.msra.mxu0 %v139
    %162 = vmatprep.subr.bf16.mxu0 0
    %163 = vmatpush1.bf16.msra.mxu0 %v140
    %164 = vmatprep.subr.bf16.mxu0 0
    %165 = vmatpush1.bf16.msra.mxu0 %v141
    %166 = vmatprep.subr.bf16.mxu0 0
    %167 = vmatpush1.bf16.msra.mxu0 0
    %168 = vmatprep.subr.bf16.mxu0 0
    %169 = vmatpush1.bf16.msra.mxu0 0
    %170 = vmatprep.subr.bf16.mxu0 0
    %171 = vmatpush1.bf16.msra.mxu0 0
    %172 = vmatprep.subr.bf16.mxu0 0
    %173 = vmatpush1.bf16.msra.mxu0 0
    %174 = vmatprep.subr.bf16.mxu0 0
    %175 = vmatpush1.bf16.msra.mxu0 0
    %176 = vmatprep.subr.bf16.mxu0 0
    %177 = vmatpush1.bf16.msra.mxu0 0
    %178 = vmatprep.subr.bf16.mxu0 0
    %179 = vmatpush1.bf16.msra.mxu0 0
    %180 = vmatprep.subr.bf16.mxu0 0
    %181 = vmatpush1.bf16.msra.mxu0 0
    %182 = vmatprep.mubr.bf16.mxu0 0
    %183 = vmatmul.mubr.bf16.gmra.mrb[0].mxu0 %v98
    %v184 = vpop.f32.mrb[0].mxu0
    %v185 = vadd.f32 %v88, %v184
    %v186 = vpop.f32.mrb[0].mxu0
    %v187 = vpop.f32.mrb[0].mxu0
    %v188 = vadd.f32 %v88, %v187
    %v189 = vpop.f32.mrb[0].mxu0
    %190 = vmatprep.mubr.bf16.mxu0 0
    %191 = vmatmul.mubr.bf16.gmra.mrb[0].mxu0 %v99
    %v192 = vpop.f32.mrb[0].mxu0
    %v193 = vadd.f32 %v88, %v192
    %v194 = vpop.f32.mrb[0].mxu0
    %v195 = vpop.f32.mrb[0].mxu0
    %v196 = vadd.f32 %v88, %v195
    %v197 = vpop.f32.mrb[0].mxu0
    %198 = vdwg.mxu0
    %v199 = vmax.f32 %v185, 0.0
    %v200 = vmax.f32 %v188, 0.0
    %v201 = vmax.f32 %v193, 0.0
    %v202 = vmax.f32 %v196, 0.0
    %v203 = vpack.c.bf16 %v200, %v199
    %v204 = vpack.c.bf16 %v202, %v201
    %v205 = vld [vmem:[#allocation7] sm:$0xf]
    %v206 = vld [vmem:[#allocation7 + $0x4] sm:$0xf]
    %v207 = vld [vmem:[#allocation7 + $0x8] sm:$0xf]
    %v208 = vld [vmem:[#allocation7 + $0xc] sm:$0xf]
    %v209 = vld [vmem:[#allocation7 + $0x10] sm:$0xf]
    %v210 = vld [vmem:[#allocation7 + $0x14] sm:$0xf]
    %v211 = vld [vmem:[#allocation7 + $0x18] sm:$0xf]
    %v212 = vld [vmem:[#allocation7 + $0x1c] sm:$0xf]
    %v213 = vld [vmem:[#allocation7 + $0x20] sm:$0xf]
    %v214 = vld [vmem:[#allocation7 + $0x24] sm:$0xf]
    %v215 = vld [vmem:[#allocation7 + $0x28] sm:$0xf]
    %v216 = vld [vmem:[#allocation7 + $0x2c] sm:$0xf]
    %v217 = vld [vmem:[#allocation7 + $0x30] sm:$0xf]
    %v218 = vld [vmem:[#allocation7 + $0x34] sm:$0xf]
    %v219 = vld [vmem:[#allocation7 + $0x38] sm:$0xf]
    %v220 = vld [vmem:[#allocation7 + $0x3c] sm:$0xf]
    %v221 = vld [vmem:[%s4] sm:$0x1]
    %v223 = vlaneseq
    %v224 = vshrl.u32 %v223, 7
    %v225 = vsub.s32 0, %v224
    %v226 = vrot.slane %v221, %v225
    %v244 = vunpack.c.l.b16 %v205
    %v245 = vunpack.c.l.b16 %v206
    %v246 = vunpack.c.l.b16 %v207
    %v247 = vunpack.c.l.b16 %v208
    %v248 = vunpack.c.l.b16 %v209
    %v249 = vunpack.c.l.b16 %v210
    %v250 = vunpack.c.l.b16 %v211
    %v251 = vunpack.c.l.b16 %v212
    %v252 = vunpack.c.l.b16 %v213
    %v253 = vunpack.c.l.b16 %v214
    %v254 = vunpack.c.l.b16 %v215
    %v255 = vunpack.c.l.b16 %v216
    %v256 = vunpack.c.l.b16 %v217
    %v257 = vunpack.c.l.b16 %v218
    %v258 = vunpack.c.l.b16 %v219
    %v259 = vunpack.c.l.b16 %v220
    %v260 = vpack.c.b16 %v245, %v244
    %v261 = vpack.c.b16 %v247, %v246
    %v262 = vpack.c.b16 %v249, %v248
    %v263 = vpack.c.b16 %v251, %v250
    %v264 = vpack.c.b16 %v253, %v252
    %v265 = vpack.c.b16 %v255, %v254
    %v266 = vpack.c.b16 %v257, %v256
    %v267 = vpack.c.b16 %v259, %v258
    %276 = vmatprep.subr.bf16.mxu0 0
    %277 = vmatpush1.bf16.msra.mxu0 %v260
    %278 = vmatprep.subr.bf16.mxu0 0
    %279 = vmatpush1.bf16.msra.mxu0 %v261
    %280 = vmatprep.subr.bf16.mxu0 0
    %281 = vmatpush1.bf16.msra.mxu0 %v262
    %282 = vmatprep.subr.bf16.mxu0 0
    %283 = vmatpush1.bf16.msra.mxu0 %v263
    %284 = vmatprep.subr.bf16.mxu0 0
    %285 = vmatpush1.bf16.msra.mxu0 %v264
    %286 = vmatprep.subr.bf16.mxu0 0
    %287 = vmatpush1.bf16.msra.mxu0 %v265
    %288 = vmatprep.subr.bf16.mxu0 0
    %289 = vmatpush1.bf16.msra.mxu0 %v266
    %290 = vmatprep.subr.bf16.mxu0 0
    %291 = vmatpush1.bf16.msra.mxu0 %v267
    %292 = vmatprep.subr.bf16.mxu0 0
    %293 = vmatpush1.bf16.msra.mxu0 0
    %294 = vmatprep.subr.bf16.mxu0 0
    %295 = vmatpush1.bf16.msra.mxu0 0
    %296 = vmatprep.subr.bf16.mxu0 0
    %297 = vmatpush1.bf16.msra.mxu0 0
    %298 = vmatprep.subr.bf16.mxu0 0
    %299 = vmatpush1.bf16.msra.mxu0 0
    %300 = vmatprep.subr.bf16.mxu0 0
    %301 = vmatpush1.bf16.msra.mxu0 0
    %302 = vmatprep.subr.bf16.mxu0 0
    %303 = vmatpush1.bf16.msra.mxu0 0
    %304 = vmatprep.subr.bf16.mxu0 0
    %305 = vmatpush1.bf16.msra.mxu0 0
    %306 = vmatprep.subr.bf16.mxu0 0
    %307 = vmatpush1.bf16.msra.mxu0 0
    %308 = vmatprep.mubr.bf16.mxu0 0
    %309 = vmatmul.mubr.bf16.gmra.mrb[0].mxu0 %v203
    %v310 = vpop.f32.mrb[0].mxu0
    %v311 = vadd.f32 %v226, %v310
    %v312 = vpop.f32.mrb[0].mxu0
    %v313 = vpop.f32.mrb[0].mxu0
    %v314 = vadd.f32 %v226, %v313
    %v315 = vpop.f32.mrb[0].mxu0
    %316 = vmatprep.mubr.bf16.mxu0 0
    %317 = vmatmul.mubr.bf16.gmra.mrb[0].mxu0 %v204
    %v318 = vpop.f32.mrb[0].mxu0
    %v319 = vadd.f32 %v226, %v318
    %v320 = vpop.f32.mrb[0].mxu0
    %v321 = vpop.f32.mrb[0].mxu0
    %v322 = vadd.f32 %v226, %v321
    %v323 = vpop.f32.mrb[0].mxu0
    %324 = vdwg.mxu0
    %325 = vst [vmem:[#allocation8] sm:$0xff] %v311
    %326 = vst [vmem:[#allocation8 + $0x8] sm:$0xff] %v314
    %327 = vst [vmem:[#allocation8 + $0x10] sm:$0xff] %v319
    %328 = vst [vmem:[#allocation8 + $0x18] sm:$0xff] %v322
    // Predicated region
    $region34: #{tpu_custom_call.1} parent=1 // pred_check
      _
    $region35: #{tpu_custom_call.1} parent=1 // pred_check_branch
      %330 = sbr.rel (0) target = $region37
    $region36: #{tpu_custom_call.1} parent=1 // pred_region
      %s332 = ssub.s32 512, 512
      %333 = vsyncadd [#allocation4], %s332
      %s334 = sshll.u32 [#allocation8], 4
      %s335 = int_to_ptr.vmem [resolvable:$true] %s334
      %340 = dma.vmem_to_hbm [thread:$0]  %s335, 512, %s5, [#allocation4], 128, 128, 8
    $region37: #{tpu_custom_call.1} parent=1 // pred_fallthru
      _
    // Predicated region
    $region38: #{tpu_custom_call.1} parent=1 // pred_check
      _
    $region39: #{tpu_custom_call.1} parent=1 // pred_check_branch
      %342 = sbr.rel (0) target = $region41
    $region40: #{tpu_custom_call.1} parent=1 // pred_region
      %343 = dma.done [#allocation4], 512
    $region41: #{tpu_custom_call.1} parent=1 // pred_fallthru
      _
    %344 = vsyncpa [#allocation3], 1
    %345 = vsyncpa [#allocation6], 1
    %346 = vsyncpa [#allocation4], 1

</llo_original>
